<compile_context>
chip_gen: v7x
topology: tpu7x:2x2x1
jax: 0.10.0
libtpu: 0.0.40
codegen_flags: <defaults>
</compile_context>

<pallas_src>
import jax
import jax.numpy as jnp
from jax.experimental import pallas as pl
from jax.experimental.pallas import tpu as pltpu

IN_DIM = 10
OUT_DIM = 5

_GELU_C0 = 0.7978845608028654             # sqrt(2/pi)
_GELU_C1 = 0.044715 * 0.7978845608028654  # folded: 0.044715 * sqrt(2/pi)


def _cdiv(a, b):
    return (a + b - 1) // b


def _choose_tile(batch, max_tb):
    """Pick a lane tile (multiple of 128) for the batch axis.

    - never wider than max_tb (VMEM budget),
    - never over-padding tiny batches (tile <= round_up(B, 128) worth of work),
    - when the batch is big enough, at least 4 grid steps so v7x's two
      TensorCores both get work and the DMA pipeline has steps to overlap.
    """
    n = _cdiv(batch, 128)                       # number of 128-lane groups
    steps = max(_cdiv(128 * n, max_tb), min(4, n))
    return 128 * _cdiv(n, steps)


def _linear_gelu_kernel(xT_ref, w_ref, b_ref, oT_ref):
    # xT_ref: (IN, TB)   batch on lanes
    # w_ref : (OUT, IN)  PyTorch Linear weight layout (resident; index const)
    # b_ref : (OUT, 1)
    # oT_ref: (OUT, TB)
    xT = xT_ref[...]
    w = w_ref[...]
    tb = xT.shape[-1]

    # K=10 contraction, unrolled on the VPU in exact f32.
    y = jnp.broadcast_to(b_ref[...], (OUT_DIM, tb)).astype(jnp.float32)
    for k in range(IN_DIM):
        y = y + w[:, k:k + 1] * xT[k:k + 1, :]          # (5,1)*(1,TB) -> (5,TB)

    # tanh-approximate GELU, matching the module's elementwise math.
    # Constants folded: y*(c0 + c1*y^2) == (y + 0.044715*y^3)*sqrt(2/pi).
    y2 = y * y
    inner = y * (_GELU_C0 + _GELU_C1 * y2)
    oT_ref[...] = (0.5 * y * (jnp.tanh(inner) + 1.0)).astype(oT_ref.dtype)


def linear_gelu_fm(x_fm, weight, bias, *, max_tb=32768):
    """Feature-major fast path (no boundary transposes).

    x_fm: (IN, B) f32, weight: (OUT, IN) f32, bias: (OUT,) f32 -> (OUT, B) f32
    """
    in_dim, batch = x_fm.shape
    assert in_dim == IN_DIM
    tb = _choose_tile(batch, max_tb)
    grid = (_cdiv(batch, tb),)                   # ragged last block is fine
    bias2d = bias.reshape(OUT_DIM, 1)

    # Double-buffered in+out tiles, plus headroom for in-kernel temporaries.
    tile_bytes = 2 * (IN_DIM + OUT_DIM) * 4 * tb
    vmem_limit = int(min(100 * 1024 * 1024, max(16 * 1024 * 1024, 4 * tile_bytes)))

    return pl.pallas_call(
        _linear_gelu_kernel,
        out_shape=jax.ShapeDtypeStruct((OUT_DIM, batch), jnp.float32),
        grid=grid,
        in_specs=[
            pl.BlockSpec((IN_DIM, tb), lambda i: (0, i)),        # x tile
            pl.BlockSpec((OUT_DIM, IN_DIM), lambda i: (0, 0)),   # whole weight
            pl.BlockSpec((OUT_DIM, 1), lambda i: (0, 0)),        # whole bias
        ],
        out_specs=pl.BlockSpec((OUT_DIM, tb), lambda i: (0, i)),
        compiler_params=pltpu.CompilerParams(
            dimension_semantics=("parallel",),
            vmem_limit_bytes=vmem_limit),
    )(x_fm, weight, bias2d)


def linear_gelu(x, weight, bias, *, max_tb=32768):
    """PyTorch-layout convenience wrapper: x (B, IN) -> (B, OUT).

    The two transposes are separate XLA ops that roughly triple HBM traffic
    for this memory-bound op; callers that can keep activations feature-major
    should use linear_gelu_fm directly.
    """
    return linear_gelu_fm(x.T, weight, bias, max_tb=max_tb).T


def _reference(x, weight, bias):
    # Exact-f32 transcription of the PyTorch forward (contraction done as an
    # elementwise sum so there is no TPU matmul-precision ambiguity).
    y = jnp.sum(x[:, None, :] * weight[None, :, :], axis=-1) + bias
    t1 = y * 0.5
    t2 = y + y * y * y * 0.044715
    t3 = t2 * 0.7978845608028654
    t4 = jnp.tanh(t3)
    t5 = t4 + 1.0
    return t1 * t5


if __name__ == "__main__":
    key = jax.random.PRNGKey(0)
    kx1, kx2, kx3, kw, kb = jax.random.split(key, 5)

    # Deterministic parameters (mimic torch.nn.Linear uniform 1/sqrt(fan_in)).
    bound = 1.0 / (IN_DIM ** 0.5)
    weight = jax.random.uniform(kw, (OUT_DIM, IN_DIM), jnp.float32, -bound, bound)
    bias = jax.random.uniform(kb, (OUT_DIM,), jnp.float32, -bound, bound)

    # Spec-shaped input: x1 = torch.randn(1, 10).
    x1 = jax.random.normal(kx1, (1, IN_DIM), jnp.float32)
    # Larger batch: multi-step grid + ragged last tile.
    x2 = jax.random.normal(kx2, (1000, IN_DIM), jnp.float32)

    for x in (x1, x2):
        out = linear_gelu(x, weight, bias)
        jax.block_until_ready(out)
        ref = _reference(x, weight, bias)
        assert out.shape == ref.shape
        assert jnp.allclose(out, ref, atol=1e-5, rtol=1e-5), \
            float(jnp.max(jnp.abs(out - ref)))

    # Feature-major fast path (no boundary transposes), odd batch size.
    x3 = jax.random.normal(kx3, (517, IN_DIM), jnp.float32)
    out_fm = linear_gelu_fm(x3.T, weight, bias)
    jax.block_until_ready(out_fm)
    assert jnp.allclose(out_fm.T, _reference(x3, weight, bias),
                        atol=1e-5, rtol=1e-5)

    print("KERNEL_OK")
</pallas_src>

<mosaic_0001>
module attributes {stable_mosaic.version = 11 : i64} {
  func.func @_linear_gelu_kernel(%arg0: i32, %arg1: memref<10x128xf32, #tpu.memory_space<vmem>>, %arg2: memref<5x10xf32, #tpu.memory_space<vmem>>, %arg3: memref<5x1xf32, #tpu.memory_space<vmem>>, %arg4: memref<5x128xf32, #tpu.memory_space<vmem>>) attributes {dimension_semantics = [#tpu.dimension_semantics<parallel>], iteration_bounds = array<i64: 1>, scalar_prefetch = 0 : i64, scratch_operands = 0 : i64, tpu.core_type = #tpu.core_type<tc>, window_params = [{transform_indices = @transform_0, window_bounds = array<i64: 10, 128>}, {pipeline_mode = #tpu.pipeline_mode<synchronous>, transform_indices = @transform_1, window_bounds = array<i64: 5, 10>}, {pipeline_mode = #tpu.pipeline_mode<synchronous>, transform_indices = @transform_2, window_bounds = array<i64: 5, 1>}, {transform_indices = @transform_3, window_bounds = array<i64: 5, 128>}]} {
    %c0 = arith.constant 0 : index
    %c0_0 = arith.constant 0 : index
    %0 = vector.load %arg1[%c0, %c0_0] : memref<10x128xf32, #tpu.memory_space<vmem>>, vector<10x128xf32>
    %c0_1 = arith.constant 0 : index
    %c0_2 = arith.constant 0 : index
    %1 = vector.load %arg2[%c0_1, %c0_2] : memref<5x10xf32, #tpu.memory_space<vmem>>, vector<5x10xf32>
    %c0_3 = arith.constant 0 : index
    %c0_4 = arith.constant 0 : index
    %2 = vector.load %arg3[%c0_3, %c0_4] : memref<5x1xf32, #tpu.memory_space<vmem>>, vector<5x1xf32>
    %3 = vector.shape_cast %2 : vector<5x1xf32> to vector<5x1xf32>
    %4 = vector.broadcast %3 : vector<5x1xf32> to vector<5x128xf32>
    %5 = vector.extract_strided_slice %1 {offsets = [0, 0], sizes = [5, 1], strides = [1, 1]} : vector<5x10xf32> to vector<5x1xf32>
    %6 = vector.extract_strided_slice %0 {offsets = [0, 0], sizes = [1, 128], strides = [1, 1]} : vector<10x128xf32> to vector<1x128xf32>
    %7 = vector.broadcast %5 : vector<5x1xf32> to vector<5x128xf32>
    %8 = vector.broadcast %6 : vector<1x128xf32> to vector<5x128xf32>
    %9 = arith.mulf %7, %8 : vector<5x128xf32>
    %10 = arith.addf %4, %9 : vector<5x128xf32>
    %11 = vector.extract_strided_slice %1 {offsets = [0, 1], sizes = [5, 1], strides = [1, 1]} : vector<5x10xf32> to vector<5x1xf32>
    %12 = vector.extract_strided_slice %0 {offsets = [1, 0], sizes = [1, 128], strides = [1, 1]} : vector<10x128xf32> to vector<1x128xf32>
    %13 = vector.broadcast %11 : vector<5x1xf32> to vector<5x128xf32>
    %14 = vector.broadcast %12 : vector<1x128xf32> to vector<5x128xf32>
    %15 = arith.mulf %13, %14 : vector<5x128xf32>
    %16 = arith.addf %10, %15 : vector<5x128xf32>
    %17 = vector.extract_strided_slice %1 {offsets = [0, 2], sizes = [5, 1], strides = [1, 1]} : vector<5x10xf32> to vector<5x1xf32>
    %18 = vector.extract_strided_slice %0 {offsets = [2, 0], sizes = [1, 128], strides = [1, 1]} : vector<10x128xf32> to vector<1x128xf32>
    %19 = vector.broadcast %17 : vector<5x1xf32> to vector<5x128xf32>
    %20 = vector.broadcast %18 : vector<1x128xf32> to vector<5x128xf32>
    %21 = arith.mulf %19, %20 : vector<5x128xf32>
    %22 = arith.addf %16, %21 : vector<5x128xf32>
    %23 = vector.extract_strided_slice %1 {offsets = [0, 3], sizes = [5, 1], strides = [1, 1]} : vector<5x10xf32> to vector<5x1xf32>
    %24 = vector.extract_strided_slice %0 {offsets = [3, 0], sizes = [1, 128], strides = [1, 1]} : vector<10x128xf32> to vector<1x128xf32>
    %25 = vector.broadcast %23 : vector<5x1xf32> to vector<5x128xf32>
    %26 = vector.broadcast %24 : vector<1x128xf32> to vector<5x128xf32>
    %27 = arith.mulf %25, %26 : vector<5x128xf32>
    %28 = arith.addf %22, %27 : vector<5x128xf32>
    %29 = vector.extract_strided_slice %1 {offsets = [0, 4], sizes = [5, 1], strides = [1, 1]} : vector<5x10xf32> to vector<5x1xf32>
    %30 = vector.extract_strided_slice %0 {offsets = [4, 0], sizes = [1, 128], strides = [1, 1]} : vector<10x128xf32> to vector<1x128xf32>
    %31 = vector.broadcast %29 : vector<5x1xf32> to vector<5x128xf32>
    %32 = vector.broadcast %30 : vector<1x128xf32> to vector<5x128xf32>
    %33 = arith.mulf %31, %32 : vector<5x128xf32>
    %34 = arith.addf %28, %33 : vector<5x128xf32>
    %35 = vector.extract_strided_slice %1 {offsets = [0, 5], sizes = [5, 1], strides = [1, 1]} : vector<5x10xf32> to vector<5x1xf32>
    %36 = vector.extract_strided_slice %0 {offsets = [5, 0], sizes = [1, 128], strides = [1, 1]} : vector<10x128xf32> to vector<1x128xf32>
    %37 = vector.broadcast %35 : vector<5x1xf32> to vector<5x128xf32>
    %38 = vector.broadcast %36 : vector<1x128xf32> to vector<5x128xf32>
    %39 = arith.mulf %37, %38 : vector<5x128xf32>
    %40 = arith.addf %34, %39 : vector<5x128xf32>
    %41 = vector.extract_strided_slice %1 {offsets = [0, 6], sizes = [5, 1], strides = [1, 1]} : vector<5x10xf32> to vector<5x1xf32>
    %42 = vector.extract_strided_slice %0 {offsets = [6, 0], sizes = [1, 128], strides = [1, 1]} : vector<10x128xf32> to vector<1x128xf32>
    %43 = vector.broadcast %41 : vector<5x1xf32> to vector<5x128xf32>
    %44 = vector.broadcast %42 : vector<1x128xf32> to vector<5x128xf32>
    %45 = arith.mulf %43, %44 : vector<5x128xf32>
    %46 = arith.addf %40, %45 : vector<5x128xf32>
    %47 = vector.extract_strided_slice %1 {offsets = [0, 7], sizes = [5, 1], strides = [1, 1]} : vector<5x10xf32> to vector<5x1xf32>
    %48 = vector.extract_strided_slice %0 {offsets = [7, 0], sizes = [1, 128], strides = [1, 1]} : vector<10x128xf32> to vector<1x128xf32>
    %49 = vector.broadcast %47 : vector<5x1xf32> to vector<5x128xf32>
    %50 = vector.broadcast %48 : vector<1x128xf32> to vector<5x128xf32>
    %51 = arith.mulf %49, %50 : vector<5x128xf32>
    %52 = arith.addf %46, %51 : vector<5x128xf32>
    %53 = vector.extract_strided_slice %1 {offsets = [0, 8], sizes = [5, 1], strides = [1, 1]} : vector<5x10xf32> to vector<5x1xf32>
    %54 = vector.extract_strided_slice %0 {offsets = [8, 0], sizes = [1, 128], strides = [1, 1]} : vector<10x128xf32> to vector<1x128xf32>
    %55 = vector.broadcast %53 : vector<5x1xf32> to vector<5x128xf32>
    %56 = vector.broadcast %54 : vector<1x128xf32> to vector<5x128xf32>
    %57 = arith.mulf %55, %56 : vector<5x128xf32>
    %58 = arith.addf %52, %57 : vector<5x128xf32>
    %59 = vector.extract_strided_slice %1 {offsets = [0, 9], sizes = [5, 1], strides = [1, 1]} : vector<5x10xf32> to vector<5x1xf32>
    %60 = vector.extract_strided_slice %0 {offsets = [9, 0], sizes = [1, 128], strides = [1, 1]} : vector<10x128xf32> to vector<1x128xf32>
    %61 = vector.broadcast %59 : vector<5x1xf32> to vector<5x128xf32>
    %62 = vector.broadcast %60 : vector<1x128xf32> to vector<5x128xf32>
    %63 = arith.mulf %61, %62 : vector<5x128xf32>
    %64 = arith.addf %58, %63 : vector<5x128xf32>
    %65 = arith.mulf %64, %64 : vector<5x128xf32>
    %cst = arith.constant 0.0356774069 : f32
    %66 = vector.broadcast %cst : f32 to vector<5x128xf32>
    %67 = arith.mulf %66, %65 : vector<5x128xf32>
    %cst_5 = arith.constant 0.797884583 : f32
    %68 = vector.broadcast %cst_5 : f32 to vector<5x128xf32>
    %69 = arith.addf %68, %67 : vector<5x128xf32>
    %70 = arith.mulf %64, %69 : vector<5x128xf32>
    %cst_6 = arith.constant 5.000000e-01 : f32
    %71 = vector.broadcast %cst_6 : f32 to vector<5x128xf32>
    %72 = arith.mulf %71, %64 : vector<5x128xf32>
    %73 = math.tanh %70 : vector<5x128xf32>
    %cst_7 = arith.constant 1.000000e+00 : f32
    %74 = vector.broadcast %cst_7 : f32 to vector<5x128xf32>
    %75 = arith.addf %73, %74 : vector<5x128xf32>
    %76 = arith.mulf %72, %75 : vector<5x128xf32>
    %c0_8 = arith.constant 0 : index
    %c0_9 = arith.constant 0 : index
    %77 = vector.load %arg4[%c0_8, %c0_9] : memref<5x128xf32, #tpu.memory_space<vmem>>, vector<5x128xf32>
    tpu.vector_store %arg4[%c0_8, %c0_9], %76 {strides = array<i32>} : memref<5x128xf32, #tpu.memory_space<vmem>>, vector<5x128xf32>,
    return
  }
  func.func @transform_0(%arg0: i32) -> (i32, i32) {
    %c0_i32 = arith.constant 0 : i32
    %c0_i32_0 = arith.constant 0 : i32
    return %c0_i32, %arg0 : i32, i32
  }
  func.func @transform_1(%arg0: i32) -> (i32, i32) {
    %c0_i32 = arith.constant 0 : i32
    %c0_i32_0 = arith.constant 0 : i32
    %c0_i32_1 = arith.constant 0 : i32
    return %c0_i32, %c0_i32_0 : i32, i32
  }
  func.func @transform_2(%arg0: i32) -> (i32, i32) {
    %c0_i32 = arith.constant 0 : i32
    %c0_i32_0 = arith.constant 0 : i32
    %c0_i32_1 = arith.constant 0 : i32
    return %c0_i32, %c0_i32_0 : i32, i32
  }
  func.func @transform_3(%arg0: i32) -> (i32, i32) {
    %c0_i32 = arith.constant 0 : i32
    %c0_i32_0 = arith.constant 0 : i32
    return %c0_i32, %arg0 : i32, i32
  }
}

</mosaic_0001>

<llo_original>
// kernel: tpu_custom_call.1
$region0: #{tpu_custom_call.1}
  #allocation0 [shape = 'u32[]', space=smem, size = 0x4, offset = 0x4, fixed_abs, tag = 'smem constant byte address 0x4 - core index']
  #allocation1 [shape = 'u32[144,128]{1,0:T(1,128)}', space=vmem, size = 0x12000, scoped, tag = 'internal scratch']
  %s0 = inlined_call_operand.vmem [shape: f32[10,1], index: 0, kind: input, shape index: {}]
  %s1 = inlined_call_operand.vmem [shape: f32[5,10], index: 1, kind: input, shape index: {}]
  %s2 = inlined_call_operand.vmem [shape: f32[5,1], index: 2, kind: input, shape index: {}]
  %s3 = inlined_call_operand.vmem [shape: f32[5,1], index: 3, kind: output, shape index: {}]
  %s4 = sld [smem:[#allocation0]]
  $region22: #{tpu_custom_call.1} parent=0
    _
  %s6 = ssub.s32 1, %s4
  %s7 = scalar_select 0, %s6, %s4
  // Predicated region
  $region2: #{tpu_custom_call.1} parent=0 // pred_check
    _
  $region3: #{tpu_custom_call.1} parent=0 // pred_check_branch
    %9 = sbr.rel (0) target = $region5
  $region4: #{tpu_custom_call.1} parent=0 // pred_region
    _
  $region5: #{tpu_custom_call.1} parent=0 // pred_fallthru
    _
  // Predicated region
  $region6: #{tpu_custom_call.1} parent=0 // pred_check
    _
  $region7: #{tpu_custom_call.1} parent=0 // pred_check_branch
    %11 = sbr.rel (0) target = $region9
  $region8: #{tpu_custom_call.1} parent=0 // pred_region
    _
  $region9: #{tpu_custom_call.1} parent=0 // pred_fallthru
    _
  // Predicated region
  $region10: #{tpu_custom_call.1} parent=0 // pred_check
    _
  $region11: #{tpu_custom_call.1} parent=0 // pred_check_branch
    %13 = sbr.rel (0) target = $region13
  $region12: #{tpu_custom_call.1} parent=0 // pred_region
    _
  $region13: #{tpu_custom_call.1} parent=0 // pred_fallthru
    _
  %v14 = vld [vmem:[%s0] sm:$0xff]
  %v15 = vld [vmem:[%s0 + $0x8] sm:$0x3]
  %v16 = vld [vmem:[%s1] sm:$0x1f]
  %v17 = vld [vmem:[%s2] sm:$0x1f]
  %19 = vset.pattern.permute.xlu0 0
  %20 = vperm.xlu0 %19, %v17
  %v21 = vpop.permute.xlu0 %20
  %24 = vset.pattern.permute.xlu0 0
  %25 = vperm.xlu0 %24, %v16
  %v26 = vpop.permute.xlu0 %25
  %v28 = vlaneseq
  %v29 = vshrl.u32 %v28, 7
  %v30 = vsub.s32 0, %v29
  %v31 = vrot.slane %v14, %v30
  %v32 = vmul.f32 %v26, %v31
  %v33 = vadd.f32 %v21, %v32
  %34 = vset.pattern.permute.xlu0 1
  %35 = vperm.xlu0 %34, %v16
  %v36 = vpop.permute.xlu0 %35
  %v38 = vlaneseq
  %v39 = vshrl.u32 %v38, 7
  %v40 = vsub.s32 1, %v39
  %v41 = vrot.slane %v14, %v40
  %v42 = vmul.f32 %v36, %v41
  %v43 = vadd.f32 %v33, %v42
  %44 = vset.pattern.permute.xlu0 2
  %45 = vperm.xlu0 %44, %v16
  %v46 = vpop.permute.xlu0 %45
  %v48 = vlaneseq
  %v49 = vshrl.u32 %v48, 7
  %v50 = vsub.s32 2, %v49
  %v51 = vrot.slane %v14, %v50
  %v52 = vmul.f32 %v46, %v51
  %v53 = vadd.f32 %v43, %v52
  %54 = vset.pattern.permute.xlu0 3
  %55 = vperm.xlu0 %54, %v16
  %v56 = vpop.permute.xlu0 %55
  %v58 = vlaneseq
  %v59 = vshrl.u32 %v58, 7
  %v60 = vsub.s32 3, %v59
  %v61 = vrot.slane %v14, %v60
  %v62 = vmul.f32 %v56, %v61
  %v63 = vadd.f32 %v53, %v62
  %64 = vset.pattern.permute.xlu0 4
  %65 = vperm.xlu0 %64, %v16
  %v66 = vpop.permute.xlu0 %65
  %v68 = vlaneseq
  %v69 = vshrl.u32 %v68, 7
  %v70 = vsub.s32 4, %v69
  %v71 = vrot.slane %v14, %v70
  %v72 = vmul.f32 %v66, %v71
  %v73 = vadd.f32 %v63, %v72
  %74 = vset.pattern.permute.xlu0 5
  %75 = vperm.xlu0 %74, %v16
  %v76 = vpop.permute.xlu0 %75
  %v78 = vlaneseq
  %v79 = vshrl.u32 %v78, 7
  %v80 = vsub.s32 5, %v79
  %v81 = vrot.slane %v14, %v80
  %v82 = vmul.f32 %v76, %v81
  %v83 = vadd.f32 %v73, %v82
  %84 = vset.pattern.permute.xlu0 6
  %85 = vperm.xlu0 %84, %v16
  %v86 = vpop.permute.xlu0 %85
  %v88 = vlaneseq
  %v89 = vshrl.u32 %v88, 7
  %v90 = vsub.s32 6, %v89
  %v91 = vrot.slane %v14, %v90
  %v92 = vmul.f32 %v86, %v91
  %v93 = vadd.f32 %v83, %v92
  %94 = vset.pattern.permute.xlu0 7
  %95 = vperm.xlu0 %94, %v16
  %v96 = vpop.permute.xlu0 %95
  %v98 = vlaneseq
  %v99 = vshrl.u32 %v98, 7
  %v100 = vsub.s32 7, %v99
  %v101 = vrot.slane %v14, %v100
  %v102 = vmul.f32 %v96, %v101
  %v103 = vadd.f32 %v93, %v102
  %104 = vset.pattern.permute.xlu0 8
  %105 = vperm.xlu0 %104, %v16
  %v106 = vpop.permute.xlu0 %105
  %v108 = vlaneseq
  %v109 = vshrl.u32 %v108, 7
  %v110 = vsub.s32 0, %v109
  %v111 = vrot.slane %v15, %v110
  %v112 = vmul.f32 %v106, %v111
  %v113 = vadd.f32 %v103, %v112
  %114 = vset.pattern.permute.xlu0 9
  %115 = vperm.xlu0 %114, %v16
  %v116 = vpop.permute.xlu0 %115
  %v118 = vlaneseq
  %v119 = vshrl.u32 %v118, 7
  %v120 = vsub.s32 1, %v119
  %v121 = vrot.slane %v15, %v120
  %v122 = vmul.f32 %v116, %v121
  %v123 = vadd.f32 %v113, %v122
  %v124 = vmul.f32 %v123, %v123
  %v125 = vmul.f32 %v124, 0.035677407
  %v126 = vadd.f32 %v125, 0.7978846
  %v127 = vmul.f32 %v123, %v126
  %v128 = vmul.f32 %v123, 0.5
  %v129 = vtanh.pop %v127
  %v130 = vadd.f32 %v129, 1.0
  %v131 = vmul.f32 %v128, %v130
  %132 = vst [vmem:[%s3] sm:$0x1f] %v131
  // Predicated region
  $region14: #{tpu_custom_call.1} parent=0 // pred_check
    _
  $region15: #{tpu_custom_call.1} parent=0 // pred_check_branch
    %134 = sbr.rel (0) target = $region17
  $region16: #{tpu_custom_call.1} parent=0 // pred_region
    _
  $region17: #{tpu_custom_call.1} parent=0 // pred_fallthru
    _
  // Predicated region
  $region18: #{tpu_custom_call.1} parent=0 // pred_check
    _
  $region19: #{tpu_custom_call.1} parent=0 // pred_check_branch
    %136 = sbr.rel (0) target = $region21
  $region20: #{tpu_custom_call.1} parent=0 // pred_region
    _
  $region21: #{tpu_custom_call.1} parent=0 // pred_fallthru
    _

</llo_original>
